<compile_context>
chip_gen: v5e
topology: v5e:2x2
jax: 0.10.0
libtpu: 0.0.40
codegen_flags: <defaults>
</compile_context>

<pallas_src>
import jax
import jax.numpy as jnp
from jax.experimental import pallas as pl
from jax.experimental.pallas import tpu as pltpu


def flatten(x: jax.Array) -> jax.Array:
    """torch `x.view(x.size(0), -1)`: metadata-only reshape, no kernel.

    This is the recommended production path (review item #1): on a contiguous
    array this is a bitcast in XLA and costs zero HBM traffic.
    """
    n = x.shape[0]
    flat = 1
    for d in x.shape[1:]:
        flat *= d
    return jnp.reshape(x, (n, flat))


def _make_hbm_copy_kernel(num_chunks: int):
    """HBM -> HBM DMA copy, split into `num_chunks` in-flight DMAs."""

    def kernel(x_hbm, o_hbm, sem):
        # Start all chunk DMAs (they stream concurrently at HBM roofline),
        # then wait for all of them.  Static Python loop: num_chunks is tiny.
        copies = []
        for c in range(num_chunks):
            cp = pltpu.make_async_copy(x_hbm.at[c], o_hbm.at[c], sem.at[c])
            cp.start()
            copies.append(cp)
        for cp in copies:
            cp.wait()

    return kernel


def _pick_num_chunks(n: int) -> int:
    # A handful of concurrent DMAs is plenty; must divide the row count so
    # every chunk is the same (static) size.
    for c in (8, 4, 2):
        if n >= c and n % c == 0:
            return c
    return 1


def flatten_pallas(x: jax.Array) -> jax.Array:
    """Materialized-copy variant of flatten, as an HBM->HBM DMA Pallas kernel."""
    n = x.shape[0]
    flat = 1
    for d in x.shape[1:]:
        flat *= d

    num_chunks = _pick_num_chunks(n)
    rows_per_chunk = n // num_chunks

    # Metadata-only reshapes in the wrapper (free on contiguous arrays):
    # present the data chunk-major so the kernel slices with a plain `.at[c]`.
    x3d = jnp.reshape(x, (num_chunks, rows_per_chunk, flat))

    itemsize = jnp.dtype(x.dtype).itemsize
    cost = pl.CostEstimate(
        flops=0,
        transcendentals=0,
        bytes_accessed=2 * n * flat * itemsize,
    )

    out3d = pl.pallas_call(
        _make_hbm_copy_kernel(num_chunks),
        out_shape=jax.ShapeDtypeStruct((num_chunks, rows_per_chunk, flat), x.dtype),
        # Leave both operands in HBM: no VMEM staging, no tiling constraints.
        in_specs=[pl.BlockSpec(memory_space=pl.ANY)],
        out_specs=pl.BlockSpec(memory_space=pl.ANY),
        scratch_shapes=[pltpu.SemaphoreType.DMA((num_chunks,))],
        cost_estimate=cost,
    )(x3d)

    # Metadata-only reshape back to the (N, flat) view.
    return jnp.reshape(out3d, (n, flat))


if __name__ == "__main__":
    key = jax.random.PRNGKey(0)
    # Small shapes consistent with the module's expected conv-feature input.
    N, C, H, W = 2, 4, 16, 16
    x = jax.random.normal(key, (N, C, H, W), dtype=jnp.float32)

    ref = x.reshape(N, -1)  # == torch x.view(x.size(0), -1)

    # Zero-copy path (recommended).
    out_view = flatten(x)
    out_view = jax.block_until_ready(out_view)
    assert out_view.shape == (N, C * H * W), out_view.shape
    assert bool(jnp.array_equal(out_view, ref)), "flatten (reshape) mismatch"

    # Pallas HBM->HBM DMA copy path.
    out = flatten_pallas(x)
    out = jax.block_until_ready(out)
    assert out.shape == (N, C * H * W), out.shape
    assert out.dtype == x.dtype, out.dtype
    assert bool(jnp.array_equal(out, ref)), "flatten_pallas kernel mismatch"

    print("KERNEL_OK")
</pallas_src>

<mosaic_0001>
module attributes {stable_mosaic.version = 11 : i64} {
  func.func @kernel(%arg0: memref<2x1x1024xf32, #tpu.memory_space<any>>, %arg1: memref<2x1x1024xf32, #tpu.memory_space<any>>, %arg2: memref<2x!tpu.dma_semaphore, #tpu.memory_space<semaphore_mem>>) attributes {dimension_semantics = [], scalar_prefetch = 0 : i64, scratch_operands = 1 : i64, tpu.core_type = #tpu.core_type<tc>} {
    %c0_i32 = arith.constant 0 : i32
    %c0_i32_0 = arith.constant 0 : i32
    %c0_i32_1 = arith.constant 0 : i32
    %c0_i32_2 = arith.constant 0 : i32
    %c0_i32_3 = arith.constant 0 : i32
    %0 = tpu.memref_slice %arg0[%c0_i32, %c0_i32_2, %c0_i32_3] : memref<2x1x1024xf32, #tpu.memory_space<any>> -> memref<1x1x1024xf32, #tpu.memory_space<any>>
    %1 = tpu.memref_squeeze %0 : memref<1x1x1024xf32, #tpu.memory_space<any>> -> memref<1x1024xf32, #tpu.memory_space<any>>
    %c0_i32_4 = arith.constant 0 : i32
    %c0_i32_5 = arith.constant 0 : i32
    %2 = tpu.memref_slice %arg1[%c0_i32_0, %c0_i32_4, %c0_i32_5] : memref<2x1x1024xf32, #tpu.memory_space<any>> -> memref<1x1x1024xf32, #tpu.memory_space<any>>
    %3 = tpu.memref_squeeze %2 : memref<1x1x1024xf32, #tpu.memory_space<any>> -> memref<1x1024xf32, #tpu.memory_space<any>>
    %4 = tpu.memref_slice %arg2[%c0_i32_1] : memref<2x!tpu.dma_semaphore, #tpu.memory_space<semaphore_mem>> -> memref<1x!tpu.dma_semaphore, #tpu.memory_space<semaphore_mem>>
    %5 = tpu.memref_squeeze %4 : memref<1x!tpu.dma_semaphore, #tpu.memory_space<semaphore_mem>> -> memref<!tpu.dma_semaphore, #tpu.memory_space<semaphore_mem>>
    tpu.enqueue_dma source(%1 : memref<1x1024xf32, #tpu.memory_space<any>>) target(%3 : memref<1x1024xf32, #tpu.memory_space<any>>) target_semaphore(%5 : memref<!tpu.dma_semaphore, #tpu.memory_space<semaphore_mem>>)
    %c1_i32 = arith.constant 1 : i32
    %c1_i32_6 = arith.constant 1 : i32
    %c1_i32_7 = arith.constant 1 : i32
    %c0_i32_8 = arith.constant 0 : i32
    %c0_i32_9 = arith.constant 0 : i32
    %6 = tpu.memref_slice %arg0[%c1_i32, %c0_i32_8, %c0_i32_9] : memref<2x1x1024xf32, #tpu.memory_space<any>> -> memref<1x1x1024xf32, #tpu.memory_space<any>>
    %7 = tpu.memref_squeeze %6 : memref<1x1x1024xf32, #tpu.memory_space<any>> -> memref<1x1024xf32, #tpu.memory_space<any>>
    %c0_i32_10 = arith.constant 0 : i32
    %c0_i32_11 = arith.constant 0 : i32
    %8 = tpu.memref_slice %arg1[%c1_i32_6, %c0_i32_10, %c0_i32_11] : memref<2x1x1024xf32, #tpu.memory_space<any>> -> memref<1x1x1024xf32, #tpu.memory_space<any>>
    %9 = tpu.memref_squeeze %8 : memref<1x1x1024xf32, #tpu.memory_space<any>> -> memref<1x1024xf32, #tpu.memory_space<any>>
    %10 = tpu.memref_slice %arg2[%c1_i32_7] : memref<2x!tpu.dma_semaphore, #tpu.memory_space<semaphore_mem>> -> memref<1x!tpu.dma_semaphore, #tpu.memory_space<semaphore_mem>>
    %11 = tpu.memref_squeeze %10 : memref<1x!tpu.dma_semaphore, #tpu.memory_space<semaphore_mem>> -> memref<!tpu.dma_semaphore, #tpu.memory_space<semaphore_mem>>
    tpu.enqueue_dma source(%7 : memref<1x1024xf32, #tpu.memory_space<any>>) target(%9 : memref<1x1024xf32, #tpu.memory_space<any>>) target_semaphore(%11 : memref<!tpu.dma_semaphore, #tpu.memory_space<semaphore_mem>>)
    %c0_i32_12 = arith.constant 0 : i32
    %c0_i32_13 = arith.constant 0 : i32
    %c0_i32_14 = arith.constant 0 : i32
    %c0_i32_15 = arith.constant 0 : i32
    %c0_i32_16 = arith.constant 0 : i32
    %12 = tpu.memref_slice %arg0[%c0_i32_12, %c0_i32_15, %c0_i32_16] : memref<2x1x1024xf32, #tpu.memory_space<any>> -> memref<1x1x1024xf32, #tpu.memory_space<any>>
    %13 = tpu.memref_squeeze %12 : memref<1x1x1024xf32, #tpu.memory_space<any>> -> memref<1x1024xf32, #tpu.memory_space<any>>
    %c0_i32_17 = arith.constant 0 : i32
    %c0_i32_18 = arith.constant 0 : i32
    %14 = tpu.memref_slice %arg1[%c0_i32_13, %c0_i32_17, %c0_i32_18] : memref<2x1x1024xf32, #tpu.memory_space<any>> -> memref<1x1x1024xf32, #tpu.memory_space<any>>
    %15 = tpu.memref_squeeze %14 : memref<1x1x1024xf32, #tpu.memory_space<any>> -> memref<1x1024xf32, #tpu.memory_space<any>>
    %16 = tpu.memref_slice %arg2[%c0_i32_14] : memref<2x!tpu.dma_semaphore, #tpu.memory_space<semaphore_mem>> -> memref<1x!tpu.dma_semaphore, #tpu.memory_space<semaphore_mem>>
    %17 = tpu.memref_squeeze %16 : memref<1x!tpu.dma_semaphore, #tpu.memory_space<semaphore_mem>> -> memref<!tpu.dma_semaphore, #tpu.memory_space<semaphore_mem>>
    tpu.wait_dma2 semaphore(%17 : memref<!tpu.dma_semaphore, #tpu.memory_space<semaphore_mem>>) src(%13 : memref<1x1024xf32, #tpu.memory_space<any>>) dst(%15 : memref<1x1024xf32, #tpu.memory_space<any>>)
    %c1_i32_19 = arith.constant 1 : i32
    %c1_i32_20 = arith.constant 1 : i32
    %c1_i32_21 = arith.constant 1 : i32
    %c0_i32_22 = arith.constant 0 : i32
    %c0_i32_23 = arith.constant 0 : i32
    %18 = tpu.memref_slice %arg0[%c1_i32_19, %c0_i32_22, %c0_i32_23] : memref<2x1x1024xf32, #tpu.memory_space<any>> -> memref<1x1x1024xf32, #tpu.memory_space<any>>
    %19 = tpu.memref_squeeze %18 : memref<1x1x1024xf32, #tpu.memory_space<any>> -> memref<1x1024xf32, #tpu.memory_space<any>>
    %c0_i32_24 = arith.constant 0 : i32
    %c0_i32_25 = arith.constant 0 : i32
    %20 = tpu.memref_slice %arg1[%c1_i32_20, %c0_i32_24, %c0_i32_25] : memref<2x1x1024xf32, #tpu.memory_space<any>> -> memref<1x1x1024xf32, #tpu.memory_space<any>>
    %21 = tpu.memref_squeeze %20 : memref<1x1x1024xf32, #tpu.memory_space<any>> -> memref<1x1024xf32, #tpu.memory_space<any>>
    %22 = tpu.memref_slice %arg2[%c1_i32_21] : memref<2x!tpu.dma_semaphore, #tpu.memory_space<semaphore_mem>> -> memref<1x!tpu.dma_semaphore, #tpu.memory_space<semaphore_mem>>
    %23 = tpu.memref_squeeze %22 : memref<1x!tpu.dma_semaphore, #tpu.memory_space<semaphore_mem>> -> memref<!tpu.dma_semaphore, #tpu.memory_space<semaphore_mem>>
    tpu.wait_dma2 semaphore(%23 : memref<!tpu.dma_semaphore, #tpu.memory_space<semaphore_mem>>) src(%19 : memref<1x1024xf32, #tpu.memory_space<any>>) dst(%21 : memref<1x1024xf32, #tpu.memory_space<any>>)
    return
  }
}

</mosaic_0001>

<llo_original>
// kernel: tpu_custom_call.1
$region0: #{tpu_custom_call.1}
  #allocation0 [shape = 'u32[]', space=smem, size = 0x4, offset = 0x4, fixed_abs, tag = 'smem constant byte address 0x4 - core index']
  #allocation1 [shape = 'u32[72,128]{1,0:T(1,128)}', space=vmem, size = 0x9000, scoped, tag = 'internal scratch']
  #allocation2 [shape = 's32[2]{0}', space=sflag, size = 0x8, scoped, tag = 'scratch operand']
  #allocation3 [shape = 's32[]', space=sflag, size = 0x4, offset = 0, fixed_abs, tag = 'sflag constant byte address 0x0 - dummy sync flag']
  #allocation4 [shape = 'u32[0]{0}', space=smem, size = 0, offset = 0, fixed_abs, tag = 'smem constant byte address 0x0 - null']
  #allocation5 [shape = 's32[]', space=sflag, size = 0x4, offset = 0, fixed_abs, tag = 'sflag constant byte address 0x0 - dummy sync flag']
  #allocation6 [shape = 'u32[0]{0}', space=smem, size = 0, offset = 0, fixed_abs, tag = 'smem constant byte address 0x0 - null']
  %s0 = inlined_call_operand.hbm [shape: f32[2,1,1024], index: 0, kind: input, shape index: {}]
  %s1 = inlined_call_operand.hbm [shape: f32[2,1,1024], index: 1, kind: output, shape index: {}]
  %s2 = sld [smem:[#allocation0]]
  $region2: #{tpu_custom_call.1} parent=0
    _
  %s4 = ssub.s32 1, %s2
  %s5 = scalar_select 0, %s4, %s2
  %s7 = sshll.u32 1, 14
  %s8 = sxor.u32 4294967295, %s7
  %s10 = sshll.u32 %s0, 4
  %s11 = int_to_ptr.hbm [resolvable:$true] %s10
  %s12 = sshll.u32 %s1, 4
  %s13 = int_to_ptr.hbm [resolvable:$true] %s12
  %16 = dma.general %s11, 128, %s13, [#allocation2], [#allocation3], [#allocation4], 0, 0
  %s17 = scalar_lea.hbm %s0, 8
  %s18 = scalar_lea.hbm %s1, 8
  %s19 = scalar_lea.sflag [#allocation2], 1
  %s21 = sshll.u32 1, 14
  %s22 = sxor.u32 4294967295, %s21
  %s24 = sshll.u32 %s17, 4
  %s25 = int_to_ptr.hbm [resolvable:$true] %s24
  %s26 = sshll.u32 %s18, 4
  %s27 = int_to_ptr.hbm [resolvable:$true] %s26
  %30 = dma.general %s25, 128, %s27, %s19, [#allocation5], [#allocation6], 0, 0
  %s31 = smul.u32 1, 8
  %s32 = sshll.u32 %s31, 4
  %33 = dma.done [#allocation2], %s32
  %s34 = sshll.u32 %s31, 4
  %35 = dma.done %s19, %s34
  %36 = vsyncmov [#allocation2]
  %s37 = vpop.sfrf %36
  %p38 = scmp.eq.s32.totalorder %s37, 0
  %p39 = pneg %p38
  %41 = shalt.err (%p39)
  %s42 = scalar_lea.sflag [#allocation2], 1
  %43 = vsyncmov %s42
  %s44 = vpop.sfrf %43
  %p45 = scmp.eq.s32.totalorder %s44, 0
  %p46 = pneg %p45
  %48 = shalt.err (%p46)

</llo_original>
